<compile_context>
chip_gen: v5e
topology: v5e:2x2
jax: 0.10.0
libtpu: 0.0.40
codegen_flags: <defaults>
</compile_context>

<pallas_src>
import jax
import jax.numpy as jnp
from jax.experimental import pallas as pl
from jax.experimental.pallas import tpu as pltpu  # noqa: F401  (TPU backend import)


def relu_conv1x1_kernel(w_ref, x_ref, o_ref):
    # ReLU in f32 (robust on v5e's f32-only VALU), then cast to bf16 so the
    # MXU runs on its native input type; accumulate in f32.
    x = jnp.maximum(x_ref[...], 0.0).astype(jnp.bfloat16)
    o_ref[...] = jnp.dot(
        w_ref[...], x, preferred_element_type=jnp.float32
    ).astype(o_ref.dtype)


def relu_conv1x1(x_nchw: jax.Array, weight_oihw: jax.Array) -> jax.Array:
    """x_nchw: [1, Cin, H, W]; weight_oihw: [Cout, Cin, 1, 1] (1x1 conv, no bias)."""
    n, cin, h, w = x_nchw.shape
    assert n == 1, "kernel specialized to the module's batch size of 1"
    cout = weight_oihw.shape[0]
    hw = h * w

    # Free reshapes: NCHW with N=1 -> [Cin, H*W]; [Cout, Cin, 1, 1] -> [Cout, Cin].
    x2d = x_nchw.reshape(cin, hw)
    # One-time weight prep (outside the kernel): squeeze + cast to bf16.
    w2d = weight_oihw.reshape(cout, cin).astype(jnp.bfloat16)

    cost = pl.CostEstimate(
        flops=2 * cout * cin * hw,
        transcendentals=0,
        bytes_accessed=2 * cout * cin + 4 * cin * hw + 4 * cout * hw,
    )

    out2d = pl.pallas_call(
        relu_conv1x1_kernel,
        out_shape=jax.ShapeDtypeStruct((cout, hw), x_nchw.dtype),
        in_specs=[
            pl.BlockSpec((cout, cin)),  # full-array block: bf16 W, single VMEM tile
            pl.BlockSpec((cin, hw)),    # full-array block: f32 X, single VMEM tile
        ],
        out_specs=pl.BlockSpec((cout, hw)),
        cost_estimate=cost,
    )(w2d, x2d)

    # [Cout, H*W] -> [1, Cout, H, W] (free reshape).
    return out2d.reshape(n, cout, h, w)


if __name__ == "__main__":
    key = jax.random.PRNGKey(0)
    kx, kw = jax.random.split(key)

    # Shapes implied by the module: x125 = [1, 864, 7, 7]; conv 864 -> 144, 1x1, no bias.
    N, CIN, H, W = 1, 864, 7, 7
    COUT = 144

    x = jax.random.normal(kx, (N, CIN, H, W), dtype=jnp.float32)
    # Deterministic synthetic Conv2d weight, PyTorch layout [Cout, Cin, 1, 1].
    weight = jax.random.normal(kw, (COUT, CIN, 1, 1), dtype=jnp.float32) * 0.02

    out = jax.block_until_ready(relu_conv1x1(x, weight))

    # Reference with matching bf16 operand rounding and f32 accumulation.
    x_relu_b = jnp.maximum(x, 0.0).astype(jnp.bfloat16).astype(jnp.float32)
    w_b = weight[:, :, 0, 0].astype(jnp.bfloat16).astype(jnp.float32)
    ref = jnp.einsum("nchw,oc->nohw", x_relu_b, w_b)

    assert out.shape == (N, COUT, H, W), out.shape
    assert jnp.allclose(out, ref, atol=1e-2, rtol=1e-2), float(
        jnp.max(jnp.abs(out - ref))
    )

    print("KERNEL_OK")
</pallas_src>

<mosaic_0001>
module attributes {stable_mosaic.version = 11 : i64} {
  func.func @relu_conv1x1_kernel(%arg0: memref<144x864xbf16, #tpu.memory_space<vmem>>, %arg1: memref<864x49xf32, #tpu.memory_space<vmem>>, %arg2: memref<144x49xf32, #tpu.memory_space<vmem>>) attributes {dimension_semantics = [], scalar_prefetch = 0 : i64, scratch_operands = 0 : i64, tpu.core_type = #tpu.core_type<tc>} {
    %c0 = arith.constant 0 : index
    %c0_0 = arith.constant 0 : index
    %0 = vector.load %arg1[%c0, %c0_0] : memref<864x49xf32, #tpu.memory_space<vmem>>, vector<864x49xf32>
    %cst = arith.constant 0.000000e+00 : f32
    %1 = vector.broadcast %cst : f32 to vector<864x49xf32>
    %2 = arith.maximumf %0, %1 : vector<864x49xf32>
    %3 = arith.truncf %2 : vector<864x49xf32> to vector<864x49xbf16>
    %c0_1 = arith.constant 0 : index
    %c0_2 = arith.constant 0 : index
    %4 = vector.load %arg0[%c0_1, %c0_2] : memref<144x864xbf16, #tpu.memory_space<vmem>>, vector<144x864xbf16>
    %cst_3 = arith.constant dense<0.000000e+00> : vector<144x49xf32>
    %5 = tpu.matmul %4, %3, %cst_3 {dimension_numbers = #tpu.dot_dimension_numbers<[1], [0], [0], [1], [0, 0, 1, 1], [], []>} : vector<144x864xbf16>, vector<864x49xbf16>, vector<144x49xf32> -> vector<144x49xf32>
    %c0_4 = arith.constant 0 : index
    %c0_5 = arith.constant 0 : index
    %6 = vector.load %arg2[%c0_4, %c0_5] : memref<144x49xf32, #tpu.memory_space<vmem>>, vector<144x49xf32>
    tpu.vector_store %arg2[%c0_4, %c0_5], %5 {strides = array<i32>} : memref<144x49xf32, #tpu.memory_space<vmem>>, vector<144x49xf32>,
    return
  }
}

</mosaic_0001>

<llo_original>
// kernel: tpu_custom_call.1
$region0: #{tpu_custom_call.1}
  #allocation0 [shape = 'u32[]', space=smem, size = 0x4, offset = 0x4, fixed_abs, tag = 'smem constant byte address 0x4 - core index']
  #allocation1 [shape = 'u32[72,128]{1,0:T(1,128)}', space=vmem, size = 0x9000, scoped, tag = 'internal scratch']
  %s0 = inlined_call_operand.vmem [shape: bf16[144,864], index: 0, kind: input, shape index: {}]
  %s1 = inlined_call_operand.vmem [shape: f32[864,49], index: 1, kind: input, shape index: {}]
  %s2 = inlined_call_operand.vmem [shape: f32[144,49], index: 2, kind: output, shape index: {}]
  %s3 = sld [smem:[#allocation0]]
  $region18: #{tpu_custom_call.1} parent=0
    _
  %s5 = ssub.s32 1, %s3
  %s6 = scalar_select 0, %s5, %s3
  // Predicated region
  $region2: #{tpu_custom_call.1} parent=0 // pred_check
    _
  $region3: #{tpu_custom_call.1} parent=0 // pred_check_branch
    %8 = sbr.rel (0) target = $region5
  $region4: #{tpu_custom_call.1} parent=0 // pred_region
    _
  $region5: #{tpu_custom_call.1} parent=0 // pred_fallthru
    _
  // Predicated region
  $region6: #{tpu_custom_call.1} parent=0 // pred_check
    _
  $region7: #{tpu_custom_call.1} parent=0 // pred_check_branch
    %10 = sbr.rel (0) target = $region9
  $region8: #{tpu_custom_call.1} parent=0 // pred_region
    _
  $region9: #{tpu_custom_call.1} parent=0 // pred_fallthru
    _
  %v12 = vld [vmem:[%s1] sm:$0xff]
  %v13 = vld [vmem:[%s1 + $0x8] sm:$0xff]
  %v14 = vld [vmem:[%s1 + $0x10] sm:$0xff]
  %v15 = vld [vmem:[%s1 + $0x18] sm:$0xff]
  %v16 = vld [vmem:[%s1 + $0x20] sm:$0xff]
  %v17 = vld [vmem:[%s1 + $0x28] sm:$0xff]
  %v18 = vld [vmem:[%s1 + $0x30] sm:$0xff]
  %v19 = vld [vmem:[%s1 + $0x38] sm:$0xff]
  %v20 = vld [vmem:[%s1 + $0x40] sm:$0xff]
  %v21 = vld [vmem:[%s1 + $0x48] sm:$0xff]
  %v22 = vld [vmem:[%s1 + $0x50] sm:$0xff]
  %v23 = vld [vmem:[%s1 + $0x58] sm:$0xff]
  %v24 = vld [vmem:[%s1 + $0x60] sm:$0xff]
  %v25 = vld [vmem:[%s1 + $0x68] sm:$0xff]
  %v26 = vld [vmem:[%s1 + $0x70] sm:$0xff]
  %v27 = vld [vmem:[%s1 + $0x78] sm:$0xff]
  %v28 = vld [vmem:[%s1 + $0x80] sm:$0xff]
  %v29 = vld [vmem:[%s1 + $0x88] sm:$0xff]
  %v30 = vld [vmem:[%s1 + $0x90] sm:$0xff]
  %v31 = vld [vmem:[%s1 + $0x98] sm:$0xff]
  %v32 = vld [vmem:[%s1 + $0xa0] sm:$0xff]
  %v33 = vld [vmem:[%s1 + $0xa8] sm:$0xff]
  %v34 = vld [vmem:[%s1 + $0xb0] sm:$0xff]
  %v35 = vld [vmem:[%s1 + $0xb8] sm:$0xff]
  %v36 = vld [vmem:[%s1 + $0xc0] sm:$0xff]
  %v37 = vld [vmem:[%s1 + $0xc8] sm:$0xff]
  %v38 = vld [vmem:[%s1 + $0xd0] sm:$0xff]
  %v39 = vld [vmem:[%s1 + $0xd8] sm:$0xff]
  %v40 = vld [vmem:[%s1 + $0xe0] sm:$0xff]
  %v41 = vld [vmem:[%s1 + $0xe8] sm:$0xff]
  %v42 = vld [vmem:[%s1 + $0xf0] sm:$0xff]
  %v43 = vld [vmem:[%s1 + $0xf8] sm:$0xff]
  %v44 = vld [vmem:[%s1 + $0x100] sm:$0xff]
  %v45 = vld [vmem:[%s1 + $0x108] sm:$0xff]
  %v46 = vld [vmem:[%s1 + $0x110] sm:$0xff]
  %v47 = vld [vmem:[%s1 + $0x118] sm:$0xff]
  %v48 = vld [vmem:[%s1 + $0x120] sm:$0xff]
  %v49 = vld [vmem:[%s1 + $0x128] sm:$0xff]
  %v50 = vld [vmem:[%s1 + $0x130] sm:$0xff]
  %v51 = vld [vmem:[%s1 + $0x138] sm:$0xff]
  %v52 = vld [vmem:[%s1 + $0x140] sm:$0xff]
  %v53 = vld [vmem:[%s1 + $0x148] sm:$0xff]
  %v54 = vld [vmem:[%s1 + $0x150] sm:$0xff]
  %v55 = vld [vmem:[%s1 + $0x158] sm:$0xff]
  %v56 = vld [vmem:[%s1 + $0x160] sm:$0xff]
  %v57 = vld [vmem:[%s1 + $0x168] sm:$0xff]
  %v58 = vld [vmem:[%s1 + $0x170] sm:$0xff]
  %v59 = vld [vmem:[%s1 + $0x178] sm:$0xff]
  %v60 = vld [vmem:[%s1 + $0x180] sm:$0xff]
  %v61 = vld [vmem:[%s1 + $0x188] sm:$0xff]
  %v62 = vld [vmem:[%s1 + $0x190] sm:$0xff]
  %v63 = vld [vmem:[%s1 + $0x198] sm:$0xff]
  %v64 = vld [vmem:[%s1 + $0x1a0] sm:$0xff]
  %v65 = vld [vmem:[%s1 + $0x1a8] sm:$0xff]
  %v66 = vld [vmem:[%s1 + $0x1b0] sm:$0xff]
  %v67 = vld [vmem:[%s1 + $0x1b8] sm:$0xff]
  %v68 = vld [vmem:[%s1 + $0x1c0] sm:$0xff]
  %v69 = vld [vmem:[%s1 + $0x1c8] sm:$0xff]
  %v70 = vld [vmem:[%s1 + $0x1d0] sm:$0xff]
  %v71 = vld [vmem:[%s1 + $0x1d8] sm:$0xff]
  %v72 = vld [vmem:[%s1 + $0x1e0] sm:$0xff]
  %v73 = vld [vmem:[%s1 + $0x1e8] sm:$0xff]
  %v74 = vld [vmem:[%s1 + $0x1f0] sm:$0xff]
  %v75 = vld [vmem:[%s1 + $0x1f8] sm:$0xff]
  %v76 = vld [vmem:[%s1 + $0x200] sm:$0xff]
  %v77 = vld [vmem:[%s1 + $0x208] sm:$0xff]
  %v78 = vld [vmem:[%s1 + $0x210] sm:$0xff]
  %v79 = vld [vmem:[%s1 + $0x218] sm:$0xff]
  %v80 = vld [vmem:[%s1 + $0x220] sm:$0xff]
  %v81 = vld [vmem:[%s1 + $0x228] sm:$0xff]
  %v82 = vld [vmem:[%s1 + $0x230] sm:$0xff]
  %v83 = vld [vmem:[%s1 + $0x238] sm:$0xff]
  %v84 = vld [vmem:[%s1 + $0x240] sm:$0xff]
  %v85 = vld [vmem:[%s1 + $0x248] sm:$0xff]
  %v86 = vld [vmem:[%s1 + $0x250] sm:$0xff]
  %v87 = vld [vmem:[%s1 + $0x258] sm:$0xff]
  %v88 = vld [vmem:[%s1 + $0x260] sm:$0xff]
  %v89 = vld [vmem:[%s1 + $0x268] sm:$0xff]
  %v90 = vld [vmem:[%s1 + $0x270] sm:$0xff]
  %v91 = vld [vmem:[%s1 + $0x278] sm:$0xff]
  %v92 = vld [vmem:[%s1 + $0x280] sm:$0xff]
  %v93 = vld [vmem:[%s1 + $0x288] sm:$0xff]
  %v94 = vld [vmem:[%s1 + $0x290] sm:$0xff]
  %v95 = vld [vmem:[%s1 + $0x298] sm:$0xff]
  %v96 = vld [vmem:[%s1 + $0x2a0] sm:$0xff]
  %v97 = vld [vmem:[%s1 + $0x2a8] sm:$0xff]
  %v98 = vld [vmem:[%s1 + $0x2b0] sm:$0xff]
  %v99 = vld [vmem:[%s1 + $0x2b8] sm:$0xff]
  %v100 = vld [vmem:[%s1 + $0x2c0] sm:$0xff]
  %v101 = vld [vmem:[%s1 + $0x2c8] sm:$0xff]
  %v102 = vld [vmem:[%s1 + $0x2d0] sm:$0xff]
  %v103 = vld [vmem:[%s1 + $0x2d8] sm:$0xff]
  %v104 = vld [vmem:[%s1 + $0x2e0] sm:$0xff]
  %v105 = vld [vmem:[%s1 + $0x2e8] sm:$0xff]
  %v106 = vld [vmem:[%s1 + $0x2f0] sm:$0xff]
  %v107 = vld [vmem:[%s1 + $0x2f8] sm:$0xff]
  %v108 = vld [vmem:[%s1 + $0x300] sm:$0xff]
  %v109 = vld [vmem:[%s1 + $0x308] sm:$0xff]
  %v110 = vld [vmem:[%s1 + $0x310] sm:$0xff]
  %v111 = vld [vmem:[%s1 + $0x318] sm:$0xff]
  %v112 = vld [vmem:[%s1 + $0x320] sm:$0xff]
  %v113 = vld [vmem:[%s1 + $0x328] sm:$0xff]
  %v114 = vld [vmem:[%s1 + $0x330] sm:$0xff]
  %v115 = vld [vmem:[%s1 + $0x338] sm:$0xff]
  %v116 = vld [vmem:[%s1 + $0x340] sm:$0xff]
  %v117 = vld [vmem:[%s1 + $0x348] sm:$0xff]
  %v118 = vld [vmem:[%s1 + $0x350] sm:$0xff]
  %v119 = vld [vmem:[%s1 + $0x358] sm:$0xff]
  %v120 = vmax.f32 %v12, 0.0
  %v121 = vmax.f32 %v13, 0.0
  %v122 = vmax.f32 %v14, 0.0
  %v123 = vmax.f32 %v15, 0.0
  %v124 = vmax.f32 %v16, 0.0
  %v125 = vmax.f32 %v17, 0.0
  %v126 = vmax.f32 %v18, 0.0
  %v127 = vmax.f32 %v19, 0.0
  %v128 = vmax.f32 %v20, 0.0
  %v129 = vmax.f32 %v21, 0.0
  %v130 = vmax.f32 %v22, 0.0
  %v131 = vmax.f32 %v23, 0.0
  %v132 = vmax.f32 %v24, 0.0
  %v133 = vmax.f32 %v25, 0.0
  %v134 = vmax.f32 %v26, 0.0
  %v135 = vmax.f32 %v27, 0.0
  %v136 = vmax.f32 %v28, 0.0
  %v137 = vmax.f32 %v29, 0.0
  %v138 = vmax.f32 %v30, 0.0
  %v139 = vmax.f32 %v31, 0.0
  %v140 = vmax.f32 %v32, 0.0
  %v141 = vmax.f32 %v33, 0.0
  %v142 = vmax.f32 %v34, 0.0
  %v143 = vmax.f32 %v35, 0.0
  %v144 = vmax.f32 %v36, 0.0
  %v145 = vmax.f32 %v37, 0.0
  %v146 = vmax.f32 %v38, 0.0
  %v147 = vmax.f32 %v39, 0.0
  %v148 = vmax.f32 %v40, 0.0
  %v149 = vmax.f32 %v41, 0.0
  %v150 = vmax.f32 %v42, 0.0
  %v151 = vmax.f32 %v43, 0.0
  %v152 = vmax.f32 %v44, 0.0
  %v153 = vmax.f32 %v45, 0.0
  %v154 = vmax.f32 %v46, 0.0
  %v155 = vmax.f32 %v47, 0.0
  %v156 = vmax.f32 %v48, 0.0
  %v157 = vmax.f32 %v49, 0.0
  %v158 = vmax.f32 %v50, 0.0
  %v159 = vmax.f32 %v51, 0.0
  %v160 = vmax.f32 %v52, 0.0
  %v161 = vmax.f32 %v53, 0.0
  %v162 = vmax.f32 %v54, 0.0
  %v163 = vmax.f32 %v55, 0.0
  %v164 = vmax.f32 %v56, 0.0
  %v165 = vmax.f32 %v57, 0.0
  %v166 = vmax.f32 %v58, 0.0
  %v167 = vmax.f32 %v59, 0.0
  %v168 = vmax.f32 %v60, 0.0
  %v169 = vmax.f32 %v61, 0.0
  %v170 = vmax.f32 %v62, 0.0
  %v171 = vmax.f32 %v63, 0.0
  %v172 = vmax.f32 %v64, 0.0
  %v173 = vmax.f32 %v65, 0.0
  %v174 = vmax.f32 %v66, 0.0
  %v175 = vmax.f32 %v67, 0.0
  %v176 = vmax.f32 %v68, 0.0
  %v177 = vmax.f32 %v69, 0.0
  %v178 = vmax.f32 %v70, 0.0
  %v179 = vmax.f32 %v71, 0.0
  %v180 = vmax.f32 %v72, 0.0
  %v181 = vmax.f32 %v73, 0.0
  %v182 = vmax.f32 %v74, 0.0
  %v183 = vmax.f32 %v75, 0.0
  %v184 = vmax.f32 %v76, 0.0
  %v185 = vmax.f32 %v77, 0.0
  %v186 = vmax.f32 %v78, 0.0
  %v187 = vmax.f32 %v79, 0.0
  %v188 = vmax.f32 %v80, 0.0
  %v189 = vmax.f32 %v81, 0.0
  %v190 = vmax.f32 %v82, 0.0
  %v191 = vmax.f32 %v83, 0.0
  %v192 = vmax.f32 %v84, 0.0
  %v193 = vmax.f32 %v85, 0.0
  %v194 = vmax.f32 %v86, 0.0
  %v195 = vmax.f32 %v87, 0.0
  %v196 = vmax.f32 %v88, 0.0
  %v197 = vmax.f32 %v89, 0.0
  %v198 = vmax.f32 %v90, 0.0
  %v199 = vmax.f32 %v91, 0.0
  %v200 = vmax.f32 %v92, 0.0
  %v201 = vmax.f32 %v93, 0.0
  %v202 = vmax.f32 %v94, 0.0
  %v203 = vmax.f32 %v95, 0.0
  %v204 = vmax.f32 %v96, 0.0
  %v205 = vmax.f32 %v97, 0.0
  %v206 = vmax.f32 %v98, 0.0
  %v207 = vmax.f32 %v99, 0.0
  %v208 = vmax.f32 %v100, 0.0
  %v209 = vmax.f32 %v101, 0.0
  %v210 = vmax.f32 %v102, 0.0
  %v211 = vmax.f32 %v103, 0.0
  %v212 = vmax.f32 %v104, 0.0
  %v213 = vmax.f32 %v105, 0.0
  %v214 = vmax.f32 %v106, 0.0
  %v215 = vmax.f32 %v107, 0.0
  %v216 = vmax.f32 %v108, 0.0
  %v217 = vmax.f32 %v109, 0.0
  %v218 = vmax.f32 %v110, 0.0
  %v219 = vmax.f32 %v111, 0.0
  %v220 = vmax.f32 %v112, 0.0
  %v221 = vmax.f32 %v113, 0.0
  %v222 = vmax.f32 %v114, 0.0
  %v223 = vmax.f32 %v115, 0.0
  %v224 = vmax.f32 %v116, 0.0
  %v225 = vmax.f32 %v117, 0.0
  %v226 = vmax.f32 %v118, 0.0
  %v227 = vmax.f32 %v119, 0.0
  %v228 = vpack.c.bf16 %v121, %v120
  %v229 = vpack.c.bf16 %v123, %v122
  %v230 = vpack.c.bf16 %v125, %v124
  %v231 = vpack.c.bf16 %v127, %v126
  %v232 = vpack.c.bf16 %v129, %v128
  %v233 = vpack.c.bf16 %v131, %v130
  %v234 = vpack.c.bf16 %v133, %v132
  %v235 = vpack.c.bf16 %v135, %v134
  %v236 = vpack.c.bf16 %v137, %v136
  %v237 = vpack.c.bf16 %v139, %v138
  %v238 = vpack.c.bf16 %v141, %v140
  %v239 = vpack.c.bf16 %v143, %v142
  %v240 = vpack.c.bf16 %v145, %v144
  %v241 = vpack.c.bf16 %v147, %v146
  %v242 = vpack.c.bf16 %v149, %v148
  %v243 = vpack.c.bf16 %v151, %v150
  %v244 = vpack.c.bf16 %v153, %v152
  %v245 = vpack.c.bf16 %v155, %v154
  %v246 = vpack.c.bf16 %v157, %v156
  %v247 = vpack.c.bf16 %v159, %v158
  %v248 = vpack.c.bf16 %v161, %v160
  %v249 = vpack.c.bf16 %v163, %v162
  %v250 = vpack.c.bf16 %v165, %v164
  %v251 = vpack.c.bf16 %v167, %v166
  %v252 = vpack.c.bf16 %v169, %v168
  %v253 = vpack.c.bf16 %v171, %v170
  %v254 = vpack.c.bf16 %v173, %v172
  %v255 = vpack.c.bf16 %v175, %v174
  %v256 = vpack.c.bf16 %v177, %v176
  %v257 = vpack.c.bf16 %v179, %v178
  %v258 = vpack.c.bf16 %v181, %v180
  %v259 = vpack.c.bf16 %v183, %v182
  %v260 = vpack.c.bf16 %v185, %v184
  %v261 = vpack.c.bf16 %v187, %v186
  %v262 = vpack.c.bf16 %v189, %v188
  %v263 = vpack.c.bf16 %v191, %v190
  %v264 = vpack.c.bf16 %v193, %v192
  %v265 = vpack.c.bf16 %v195, %v194
  %v266 = vpack.c.bf16 %v197, %v196
  %v267 = vpack.c.bf16 %v199, %v198
  %v268 = vpack.c.bf16 %v201, %v200
  %v269 = vpack.c.bf16 %v203, %v202
  %v270 = vpack.c.bf16 %v205, %v204
  %v271 = vpack.c.bf16 %v207, %v206
  %v272 = vpack.c.bf16 %v209, %v208
  %v273 = vpack.c.bf16 %v211, %v210
  %v274 = vpack.c.bf16 %v213, %v212
  %v275 = vpack.c.bf16 %v215, %v214
  %v276 = vpack.c.bf16 %v217, %v216
  %v277 = vpack.c.bf16 %v219, %v218
  %v278 = vpack.c.bf16 %v221, %v220
  %v279 = vpack.c.bf16 %v223, %v222
  %v280 = vpack.c.bf16 %v225, %v224
  %v281 = vpack.c.bf16 %v227, %v226
  %v282 = vld [vmem:[%s0] sm:$0xff]
  %v283 = vld [vmem:[%s0 + $0x8] sm:$0xff]
  %v284 = vld [vmem:[%s0 + $0x10] sm:$0xff]
  %v285 = vld [vmem:[%s0 + $0x18] sm:$0xf]
  %v286 = vld [vmem:[%s0 + $0x1c] sm:$0xff]
  %v287 = vld [vmem:[%s0 + $0x24] sm:$0xff]
  %v288 = vld [vmem:[%s0 + $0x2c] sm:$0xff]
  %v289 = vld [vmem:[%s0 + $0x34] sm:$0xf]
  %v290 = vld [vmem:[%s0 + $0x38] sm:$0xff]
  %v291 = vld [vmem:[%s0 + $0x40] sm:$0xff]
  %v292 = vld [vmem:[%s0 + $0x48] sm:$0xff]
  %v293 = vld [vmem:[%s0 + $0x50] sm:$0xf]
  %v294 = vld [vmem:[%s0 + $0x54] sm:$0xff]
  %v295 = vld [vmem:[%s0 + $0x5c] sm:$0xff]
  %v296 = vld [vmem:[%s0 + $0x64] sm:$0xff]
  %v297 = vld [vmem:[%s0 + $0x6c] sm:$0xf]
  %v298 = vld [vmem:[%s0 + $0x70] sm:$0xff]
  %v299 = vld [vmem:[%s0 + $0x78] sm:$0xff]
  %v300 = vld [vmem:[%s0 + $0x80] sm:$0xff]
  %v301 = vld [vmem:[%s0 + $0x88] sm:$0xf]
  %v302 = vld [vmem:[%s0 + $0x8c] sm:$0xff]
  %v303 = vld [vmem:[%s0 + $0x94] sm:$0xff]
  %v304 = vld [vmem:[%s0 + $0x9c] sm:$0xff]
  %v305 = vld [vmem:[%s0 + $0xa4] sm:$0xf]
  %v306 = vld [vmem:[%s0 + $0xa8] sm:$0xff]
  %v307 = vld [vmem:[%s0 + $0xb0] sm:$0xff]
  %v308 = vld [vmem:[%s0 + $0xb8] sm:$0xff]
  %v309 = vld [vmem:[%s0 + $0xc0] sm:$0xf]
  %v310 = vld [vmem:[%s0 + $0xc4] sm:$0xff]
  %v311 = vld [vmem:[%s0 + $0xcc] sm:$0xff]
  %v312 = vld [vmem:[%s0 + $0xd4] sm:$0xff]
  %v313 = vld [vmem:[%s0 + $0xdc] sm:$0xf]
  %v314 = vld [vmem:[%s0 + $0xe0] sm:$0xff]
  %v315 = vld [vmem:[%s0 + $0xe8] sm:$0xff]
  %v316 = vld [vmem:[%s0 + $0xf0] sm:$0xff]
  %v317 = vld [vmem:[%s0 + $0xf8] sm:$0xf]
  %v318 = vld [vmem:[%s0 + $0xfc] sm:$0xff]
  %v319 = vld [vmem:[%s0 + $0x104] sm:$0xff]
  %v320 = vld [vmem:[%s0 + $0x10c] sm:$0xff]
  %v321 = vld [vmem:[%s0 + $0x114] sm:$0xf]
  %v322 = vld [vmem:[%s0 + $0x118] sm:$0xff]
  %v323 = vld [vmem:[%s0 + $0x120] sm:$0xff]
  %v324 = vld [vmem:[%s0 + $0x128] sm:$0xff]
  %v325 = vld [vmem:[%s0 + $0x130] sm:$0xf]
  %v326 = vld [vmem:[%s0 + $0x134] sm:$0xff]
  %v327 = vld [vmem:[%s0 + $0x13c] sm:$0xff]
  %v328 = vld [vmem:[%s0 + $0x144] sm:$0xff]
  %v329 = vld [vmem:[%s0 + $0x14c] sm:$0xf]
  %v330 = vld [vmem:[%s0 + $0x150] sm:$0xff]
  %v331 = vld [vmem:[%s0 + $0x158] sm:$0xff]
  %v332 = vld [vmem:[%s0 + $0x160] sm:$0xff]
  %v333 = vld [vmem:[%s0 + $0x168] sm:$0xf]
  %v334 = vld [vmem:[%s0 + $0x16c] sm:$0xff]
  %v335 = vld [vmem:[%s0 + $0x174] sm:$0xff]
  %v336 = vld [vmem:[%s0 + $0x17c] sm:$0xff]
  %v337 = vld [vmem:[%s0 + $0x184] sm:$0xf]
  %v338 = vld [vmem:[%s0 + $0x188] sm:$0xff]
  %v339 = vld [vmem:[%s0 + $0x190] sm:$0xff]
  %v340 = vld [vmem:[%s0 + $0x198] sm:$0xff]
  %v341 = vld [vmem:[%s0 + $0x1a0] sm:$0xf]
  %v342 = vld [vmem:[%s0 + $0x1a4] sm:$0xff]
  %v343 = vld [vmem:[%s0 + $0x1ac] sm:$0xff]
  %v344 = vld [vmem:[%s0 + $0x1b4] sm:$0xff]
  %v345 = vld [vmem:[%s0 + $0x1bc] sm:$0xf]
  %v346 = vld [vmem:[%s0 + $0x1c0] sm:$0xff]
  %v347 = vld [vmem:[%s0 + $0x1c8] sm:$0xff]
  %v348 = vld [vmem:[%s0 + $0x1d0] sm:$0xff]
  %v349 = vld [vmem:[%s0 + $0x1d8] sm:$0xf]
  %v350 = vld [vmem:[%s0 + $0x1dc] sm:$0xff]
  %v351 = vld [vmem:[%s0 + $0x1e4] sm:$0xff]
  %v352 = vld [vmem:[%s0 + $0x1ec] sm:$0xff]
  %v353 = vld [vmem:[%s0 + $0x1f4] sm:$0xf]
  %v426 = vunpack.c.l.b16 %v282
  %v427 = vunpack.c.h.b16 %v282
  %v428 = vunpack.c.l.b16 %v283
  %v429 = vunpack.c.h.b16 %v283
  %v430 = vunpack.c.l.b16 %v284
  %v431 = vunpack.c.h.b16 %v284
  %v432 = vunpack.c.l.b16 %v285
  %v433 = vunpack.c.l.b16 %v286
  %v434 = vunpack.c.h.b16 %v286
  %v435 = vunpack.c.l.b16 %v287
  %v436 = vunpack.c.h.b16 %v287
  %v437 = vunpack.c.l.b16 %v288
  %v438 = vunpack.c.h.b16 %v288
  %v439 = vunpack.c.l.b16 %v289
  %v440 = vunpack.c.l.b16 %v290
  %v441 = vunpack.c.h.b16 %v290
  %v442 = vunpack.c.l.b16 %v291
  %v443 = vunpack.c.h.b16 %v291
  %v444 = vunpack.c.l.b16 %v292
  %v445 = vunpack.c.h.b16 %v292
  %v446 = vunpack.c.l.b16 %v293
  %v447 = vunpack.c.l.b16 %v294
  %v448 = vunpack.c.h.b16 %v294
  %v449 = vunpack.c.l.b16 %v295
  %v450 = vunpack.c.h.b16 %v295
  %v451 = vunpack.c.l.b16 %v296
  %v452 = vunpack.c.h.b16 %v296
  %v453 = vunpack.c.l.b16 %v297
  %v454 = vunpack.c.l.b16 %v298
  %v455 = vunpack.c.h.b16 %v298
  %v456 = vunpack.c.l.b16 %v299
  %v457 = vunpack.c.h.b16 %v299
  %v458 = vunpack.c.l.b16 %v300
  %v459 = vunpack.c.h.b16 %v300
  %v460 = vunpack.c.l.b16 %v301
  %v461 = vunpack.c.l.b16 %v302
  %v462 = vunpack.c.h.b16 %v302
  %v463 = vunpack.c.l.b16 %v303
  %v464 = vunpack.c.h.b16 %v303
  %v465 = vunpack.c.l.b16 %v304
  %v466 = vunpack.c.h.b16 %v304
  %v467 = vunpack.c.l.b16 %v305
  %v468 = vunpack.c.l.b16 %v306
  %v469 = vunpack.c.h.b16 %v306
  %v470 = vunpack.c.l.b16 %v307
  %v471 = vunpack.c.h.b16 %v307
  %v472 = vunpack.c.l.b16 %v308
  %v473 = vunpack.c.h.b16 %v308
  %v474 = vunpack.c.l.b16 %v309
  %v475 = vunpack.c.l.b16 %v310
  %v476 = vunpack.c.h.b16 %v310
  %v477 = vunpack.c.l.b16 %v311
  %v478 = vunpack.c.h.b16 %v311
  %v479 = vunpack.c.l.b16 %v312
  %v480 = vunpack.c.h.b16 %v312
  %v481 = vunpack.c.l.b16 %v313
  %v482 = vunpack.c.l.b16 %v314
  %v483 = vunpack.c.h.b16 %v314
  %v484 = vunpack.c.l.b16 %v315
  %v485 = vunpack.c.h.b16 %v315
  %v486 = vunpack.c.l.b16 %v316
  %v487 = vunpack.c.h.b16 %v316
  %v488 = vunpack.c.l.b16 %v317
  %v489 = vunpack.c.l.b16 %v318
  %v490 = vunpack.c.h.b16 %v318
  %v491 = vunpack.c.l.b16 %v319
  %v492 = vunpack.c.h.b16 %v319
  %v493 = vunpack.c.l.b16 %v320
  %v494 = vunpack.c.h.b16 %v320
  %v495 = vunpack.c.l.b16 %v321
  %v496 = vunpack.c.l.b16 %v322
  %v497 = vunpack.c.h.b16 %v322
  %v498 = vunpack.c.l.b16 %v323
  %v499 = vunpack.c.h.b16 %v323
  %v500 = vunpack.c.l.b16 %v324
  %v501 = vunpack.c.h.b16 %v324
  %v502 = vunpack.c.l.b16 %v325
  %v503 = vunpack.c.l.b16 %v326
  %v504 = vunpack.c.h.b16 %v326
  %v505 = vunpack.c.l.b16 %v327
  %v506 = vunpack.c.h.b16 %v327
  %v507 = vunpack.c.l.b16 %v328
  %v508 = vunpack.c.h.b16 %v328
  %v509 = vunpack.c.l.b16 %v329
  %v510 = vunpack.c.l.b16 %v330
  %v511 = vunpack.c.h.b16 %v330
  %v512 = vunpack.c.l.b16 %v331
  %v513 = vunpack.c.h.b16 %v331
  %v514 = vunpack.c.l.b16 %v332
  %v515 = vunpack.c.h.b16 %v332
  %v516 = vunpack.c.l.b16 %v333
  %v517 = vunpack.c.l.b16 %v334
  %v518 = vunpack.c.h.b16 %v334
  %v519 = vunpack.c.l.b16 %v335
  %v520 = vunpack.c.h.b16 %v335
  %v521 = vunpack.c.l.b16 %v336
  %v522 = vunpack.c.h.b16 %v336
  %v523 = vunpack.c.l.b16 %v337
  %v524 = vunpack.c.l.b16 %v338
  %v525 = vunpack.c.h.b16 %v338
  %v526 = vunpack.c.l.b16 %v339
  %v527 = vunpack.c.h.b16 %v339
  %v528 = vunpack.c.l.b16 %v340
  %v529 = vunpack.c.h.b16 %v340
  %v530 = vunpack.c.l.b16 %v341
  %v531 = vunpack.c.l.b16 %v342
  %v532 = vunpack.c.h.b16 %v342
  %v533 = vunpack.c.l.b16 %v343
  %v534 = vunpack.c.h.b16 %v343
  %v535 = vunpack.c.l.b16 %v344
  %v536 = vunpack.c.h.b16 %v344
  %v537 = vunpack.c.l.b16 %v345
  %v538 = vunpack.c.l.b16 %v346
  %v539 = vunpack.c.h.b16 %v346
  %v540 = vunpack.c.l.b16 %v347
  %v541 = vunpack.c.h.b16 %v347
  %v542 = vunpack.c.l.b16 %v348
  %v543 = vunpack.c.h.b16 %v348
  %v544 = vunpack.c.l.b16 %v349
  %v545 = vunpack.c.l.b16 %v350
  %v546 = vunpack.c.h.b16 %v350
  %v547 = vunpack.c.l.b16 %v351
  %v548 = vunpack.c.h.b16 %v351
  %v549 = vunpack.c.l.b16 %v352
  %v550 = vunpack.c.h.b16 %v352
  %v551 = vunpack.c.l.b16 %v353
  %v552 = vpack.c.b16 %v433, %v426
  %v553 = vpack.c.b16 %v434, %v427
  %v554 = vpack.c.b16 %v435, %v428
  %v555 = vpack.c.b16 %v436, %v429
  %v556 = vpack.c.b16 %v437, %v430
  %v557 = vpack.c.b16 %v438, %v431
  %v558 = vpack.c.b16 %v439, %v432
  %v559 = vpack.c.b16 %v447, %v440
  %v560 = vpack.c.b16 %v448, %v441
  %v561 = vpack.c.b16 %v449, %v442
  %v562 = vpack.c.b16 %v450, %v443
  %v563 = vpack.c.b16 %v451, %v444
  %v564 = vpack.c.b16 %v452, %v445
  %v565 = vpack.c.b16 %v453, %v446
  %v566 = vpack.c.b16 %v461, %v454
  %v567 = vpack.c.b16 %v462, %v455
  %v568 = vpack.c.b16 %v463, %v456
  %v569 = vpack.c.b16 %v464, %v457
  %v570 = vpack.c.b16 %v465, %v458
  %v571 = vpack.c.b16 %v466, %v459
  %v572 = vpack.c.b16 %v467, %v460
  %v573 = vpack.c.b16 %v475, %v468
  %v574 = vpack.c.b16 %v476, %v469
  %v575 = vpack.c.b16 %v477, %v470
  %v576 = vpack.c.b16 %v478, %v471
  %v577 = vpack.c.b16 %v479, %v472
  %v578 = vpack.c.b16 %v480, %v473
  %v579 = vpack.c.b16 %v481, %v474
  %v580 = vpack.c.b16 %v489, %v482
  %v581 = vpack.c.b16 %v490, %v483
  %v582 = vpack.c.b16 %v491, %v484
  %v583 = vpack.c.b16 %v492, %v485
  %v584 = vpack.c.b16 %v493, %v486
  %v585 = vpack.c.b16 %v494, %v487
  %v586 = vpack.c.b16 %v495, %v488
  %v587 = vpack.c.b16 %v503, %v496
  %v588 = vpack.c.b16 %v504, %v497
  %v589 = vpack.c.b16 %v505, %v498
  %v590 = vpack.c.b16 %v506, %v499
  %v591 = vpack.c.b16 %v507, %v500
  %v592 = vpack.c.b16 %v508, %v501
  %v593 = vpack.c.b16 %v509, %v502
  %v594 = vpack.c.b16 %v517, %v510
  %v595 = vpack.c.b16 %v518, %v511
  %v596 = vpack.c.b16 %v519, %v512
  %v597 = vpack.c.b16 %v520, %v513
  %v598 = vpack.c.b16 %v521, %v514
  %v599 = vpack.c.b16 %v522, %v515
  %v600 = vpack.c.b16 %v523, %v516
  %v601 = vpack.c.b16 %v531, %v524
  %v602 = vpack.c.b16 %v532, %v525
  %v603 = vpack.c.b16 %v533, %v526
  %v604 = vpack.c.b16 %v534, %v527
  %v605 = vpack.c.b16 %v535, %v528
  %v606 = vpack.c.b16 %v536, %v529
  %v607 = vpack.c.b16 %v537, %v530
  %v608 = vpack.c.b16 %v545, %v538
  %v609 = vpack.c.b16 %v546, %v539
  %v610 = vpack.c.b16 %v547, %v540
  %v611 = vpack.c.b16 %v548, %v541
  %v612 = vpack.c.b16 %v549, %v542
  %v613 = vpack.c.b16 %v550, %v543
  %v614 = vpack.c.b16 %v551, %v544
  %vm669 = vcmask 785408
  %v671 = vsel %vm669, %v558, 0
  %v674 = vsel %vm669, %v565, 0
  %v677 = vsel %vm669, %v572, 0
  %v680 = vsel %vm669, %v579, 0
  %v683 = vsel %vm669, %v586, 0
  %v686 = vsel %vm669, %v593, 0
  %v689 = vsel %vm669, %v600, 0
  %v692 = vsel %vm669, %v607, 0
  %v695 = vsel %vm669, %v614, 0
  %697 = vmatpush.bf16.msra.mxu0 %v235
  %698 = vmatpush.bf16.msra.mxu0 %v234
  %699 = vmatpush.bf16.msra.mxu0 %v233
  %700 = vmatpush.bf16.msra.mxu0 %v232
  %701 = vmatpush.bf16.msra.mxu0 %v231
  %702 = vmatpush.bf16.msra.mxu0 %v230
  %703 = vmatpush.bf16.msra.mxu0 %v229
  %704 = vmatpush.bf16.msra.mxu0 %v228
  %705 = vmatmul.bf16.gmra.mxu0 %v552
  %v706 = vpop.f32.mrf.mxu0
  %v707 = vadd.f32 0.0, %v706
  %v708 = vpop.f32.mrf.mxu0
  %v709 = vadd.f32 0.0, %v708
  %710 = vmatmul.bf16.gmra.mxu0 %v559
  %v711 = vpop.f32.mrf.mxu0
  %v712 = vadd.f32 0.0, %v711
  %v713 = vpop.f32.mrf.mxu0
  %v714 = vadd.f32 0.0, %v713
  %715 = vmatmul.bf16.gmra.mxu0 %v566
  %v716 = vpop.f32.mrf.mxu0
  %v717 = vadd.f32 0.0, %v716
  %v718 = vpop.f32.mrf.mxu0
  %v719 = vadd.f32 0.0, %v718
  %720 = vmatmul.bf16.gmra.mxu0 %v573
  %v721 = vpop.f32.mrf.mxu0
  %v722 = vadd.f32 0.0, %v721
  %v723 = vpop.f32.mrf.mxu0
  %v724 = vadd.f32 0.0, %v723
  %725 = vmatmul.bf16.gmra.mxu0 %v580
  %v726 = vpop.f32.mrf.mxu0
  %v727 = vadd.f32 0.0, %v726
  %v728 = vpop.f32.mrf.mxu0
  %v729 = vadd.f32 0.0, %v728
  %730 = vmatmul.bf16.gmra.mxu0 %v587
  %v731 = vpop.f32.mrf.mxu0
  %v732 = vadd.f32 0.0, %v731
  %v733 = vpop.f32.mrf.mxu0
  %v734 = vadd.f32 0.0, %v733
  %735 = vmatmul.bf16.gmra.mxu0 %v594
  %v736 = vpop.f32.mrf.mxu0
  %v737 = vadd.f32 0.0, %v736
  %v738 = vpop.f32.mrf.mxu0
  %v739 = vadd.f32 0.0, %v738
  %740 = vmatmul.bf16.gmra.mxu0 %v601
  %v741 = vpop.f32.mrf.mxu0
  %v742 = vadd.f32 0.0, %v741
  %v743 = vpop.f32.mrf.mxu0
  %v744 = vadd.f32 0.0, %v743
  %745 = vmatmul.bf16.gmra.mxu0 %v608
  %v746 = vpop.f32.mrf.mxu0
  %v747 = vadd.f32 0.0, %v746
  %v748 = vpop.f32.mrf.mxu0
  %v749 = vadd.f32 0.0, %v748
  %750 = vdwg.mxu0
  %751 = vmatpush.bf16.msra.mxu0 %v243
  %752 = vmatpush.bf16.msra.mxu0 %v242
  %753 = vmatpush.bf16.msra.mxu0 %v241
  %754 = vmatpush.bf16.msra.mxu0 %v240
  %755 = vmatpush.bf16.msra.mxu0 %v239
  %756 = vmatpush.bf16.msra.mxu0 %v238
  %757 = vmatpush.bf16.msra.mxu0 %v237
  %758 = vmatpush.bf16.msra.mxu0 %v236
  %759 = vmatmul.bf16.gmra.mxu0 %v553
  %v760 = vpop.f32.mrf.mxu0
  %v761 = vadd.f32 %v707, %v760
  %v762 = vpop.f32.mrf.mxu0
  %v763 = vadd.f32 %v709, %v762
  %764 = vmatmul.bf16.gmra.mxu0 %v560
  %v765 = vpop.f32.mrf.mxu0
  %v766 = vadd.f32 %v712, %v765
  %v767 = vpop.f32.mrf.mxu0
  %v768 = vadd.f32 %v714, %v767
  %769 = vmatmul.bf16.gmra.mxu0 %v567
  %v770 = vpop.f32.mrf.mxu0
  %v771 = vadd.f32 %v717, %v770
  %v772 = vpop.f32.mrf.mxu0
  %v773 = vadd.f32 %v719, %v772
  %774 = vmatmul.bf16.gmra.mxu0 %v574
  %v775 = vpop.f32.mrf.mxu0
  %v776 = vadd.f32 %v722, %v775
  %v777 = vpop.f32.mrf.mxu0
  %v778 = vadd.f32 %v724, %v777
  %779 = vmatmul.bf16.gmra.mxu0 %v581
  %v780 = vpop.f32.mrf.mxu0
  %v781 = vadd.f32 %v727, %v780
  %v782 = vpop.f32.mrf.mxu0
  %v783 = vadd.f32 %v729, %v782
  %784 = vmatmul.bf16.gmra.mxu0 %v588
  %v785 = vpop.f32.mrf.mxu0
  %v786 = vadd.f32 %v732, %v785
  %v787 = vpop.f32.mrf.mxu0
  %v788 = vadd.f32 %v734, %v787
  %789 = vmatmul.bf16.gmra.mxu0 %v595
  %v790 = vpop.f32.mrf.mxu0
  %v791 = vadd.f32 %v737, %v790
  %v792 = vpop.f32.mrf.mxu0
  %v793 = vadd.f32 %v739, %v792
  %794 = vmatmul.bf16.gmra.mxu0 %v602
  %v795 = vpop.f32.mrf.mxu0
  %v796 = vadd.f32 %v742, %v795
  %v797 = vpop.f32.mrf.mxu0
  %v798 = vadd.f32 %v744, %v797
  %799 = vmatmul.bf16.gmra.mxu0 %v609
  %v800 = vpop.f32.mrf.mxu0
  %v801 = vadd.f32 %v747, %v800
  %v802 = vpop.f32.mrf.mxu0
  %v803 = vadd.f32 %v749, %v802
  %804 = vdwg.mxu0
  %805 = vmatpush.bf16.msra.mxu0 %v251
  %806 = vmatpush.bf16.msra.mxu0 %v250
  %807 = vmatpush.bf16.msra.mxu0 %v249
  %808 = vmatpush.bf16.msra.mxu0 %v248
  %809 = vmatpush.bf16.msra.mxu0 %v247
  %810 = vmatpush.bf16.msra.mxu0 %v246
  %811 = vmatpush.bf16.msra.mxu0 %v245
  %812 = vmatpush.bf16.msra.mxu0 %v244
  %813 = vmatmul.bf16.gmra.mxu0 %v554
  %v814 = vpop.f32.mrf.mxu0
  %v815 = vadd.f32 %v761, %v814
  %v816 = vpop.f32.mrf.mxu0
  %v817 = vadd.f32 %v763, %v816
  %818 = vmatmul.bf16.gmra.mxu0 %v561
  %v819 = vpop.f32.mrf.mxu0
  %v820 = vadd.f32 %v766, %v819
  %v821 = vpop.f32.mrf.mxu0
  %v822 = vadd.f32 %v768, %v821
  %823 = vmatmul.bf16.gmra.mxu0 %v568
  %v824 = vpop.f32.mrf.mxu0
  %v825 = vadd.f32 %v771, %v824
  %v826 = vpop.f32.mrf.mxu0
  %v827 = vadd.f32 %v773, %v826
  %828 = vmatmul.bf16.gmra.mxu0 %v575
  %v829 = vpop.f32.mrf.mxu0
  %v830 = vadd.f32 %v776, %v829
  %v831 = vpop.f32.mrf.mxu0
  %v832 = vadd.f32 %v778, %v831
  %833 = vmatmul.bf16.gmra.mxu0 %v582
  %v834 = vpop.f32.mrf.mxu0
  %v835 = vadd.f32 %v781, %v834
  %v836 = vpop.f32.mrf.mxu0
  %v837 = vadd.f32 %v783, %v836
  %838 = vmatmul.bf16.gmra.mxu0 %v589
  %v839 = vpop.f32.mrf.mxu0
  %v840 = vadd.f32 %v786, %v839
  %v841 = vpop.f32.mrf.mxu0
  %v842 = vadd.f32 %v788, %v841
  %843 = vmatmul.bf16.gmra.mxu0 %v596
  %v844 = vpop.f32.mrf.mxu0
  %v845 = vadd.f32 %v791, %v844
  %v846 = vpop.f32.mrf.mxu0
  %v847 = vadd.f32 %v793, %v846
  %848 = vmatmul.bf16.gmra.mxu0 %v603
  %v849 = vpop.f32.mrf.mxu0
  %v850 = vadd.f32 %v796, %v849
  %v851 = vpop.f32.mrf.mxu0
  %v852 = vadd.f32 %v798, %v851
  %853 = vmatmul.bf16.gmra.mxu0 %v610
  %v854 = vpop.f32.mrf.mxu0
  %v855 = vadd.f32 %v801, %v854
  %v856 = vpop.f32.mrf.mxu0
  %v857 = vadd.f32 %v803, %v856
  %858 = vdwg.mxu0
  %859 = vmatpush.bf16.msra.mxu0 %v259
  %860 = vmatpush.bf16.msra.mxu0 %v258
  %861 = vmatpush.bf16.msra.mxu0 %v257
  %862 = vmatpush.bf16.msra.mxu0 %v256
  %863 = vmatpush.bf16.msra.mxu0 %v255
  %864 = vmatpush.bf16.msra.mxu0 %v254
  %865 = vmatpush.bf16.msra.mxu0 %v253
  %866 = vmatpush.bf16.msra.mxu0 %v252
  %867 = vmatmul.bf16.gmra.mxu0 %v555
  %v868 = vpop.f32.mrf.mxu0
  %v869 = vadd.f32 %v815, %v868
  %v870 = vpop.f32.mrf.mxu0
  %v871 = vadd.f32 %v817, %v870
  %872 = vmatmul.bf16.gmra.mxu0 %v562
  %v873 = vpop.f32.mrf.mxu0
  %v874 = vadd.f32 %v820, %v873
  %v875 = vpop.f32.mrf.mxu0
  %v876 = vadd.f32 %v822, %v875
  %877 = vmatmul.bf16.gmra.mxu0 %v569
  %v878 = vpop.f32.mrf.mxu0
  %v879 = vadd.f32 %v825, %v878
  %v880 = vpop.f32.mrf.mxu0
  %v881 = vadd.f32 %v827, %v880
  %882 = vmatmul.bf16.gmra.mxu0 %v576
  %v883 = vpop.f32.mrf.mxu0
  %v884 = vadd.f32 %v830, %v883
  %v885 = vpop.f32.mrf.mxu0
  %v886 = vadd.f32 %v832, %v885
  %887 = vmatmul.bf16.gmra.mxu0 %v583
  %v888 = vpop.f32.mrf.mxu0
  %v889 = vadd.f32 %v835, %v888
  %v890 = vpop.f32.mrf.mxu0
  %v891 = vadd.f32 %v837, %v890
  %892 = vmatmul.bf16.gmra.mxu0 %v590
  %v893 = vpop.f32.mrf.mxu0
  %v894 = vadd.f32 %v840, %v893
  %v895 = vpop.f32.mrf.mxu0
  %v896 = vadd.f32 %v842, %v895
  %897 = vmatmul.bf16.gmra.mxu0 %v597
  %v898 = vpop.f32.mrf.mxu0
  %v899 = vadd.f32 %v845, %v898
  %v900 = vpop.f32.mrf.mxu0
  %v901 = vadd.f32 %v847, %v900
  %902 = vmatmul.bf16.gmra.mxu0 %v604
  %v903 = vpop.f32.mrf.mxu0
  %v904 = vadd.f32 %v850, %v903
  %v905 = vpop.f32.mrf.mxu0
  %v906 = vadd.f32 %v852, %v905
  %907 = vmatmul.bf16.gmra.mxu0 %v611
  %v908 = vpop.f32.mrf.mxu0
  %v909 = vadd.f32 %v855, %v908
  %v910 = vpop.f32.mrf.mxu0
  %v911 = vadd.f32 %v857, %v910
  %912 = vdwg.mxu0
  %913 = vmatpush.bf16.msra.mxu0 %v267
  %914 = vmatpush.bf16.msra.mxu0 %v266
  %915 = vmatpush.bf16.msra.mxu0 %v265
  %916 = vmatpush.bf16.msra.mxu0 %v264
  %917 = vmatpush.bf16.msra.mxu0 %v263
  %918 = vmatpush.bf16.msra.mxu0 %v262
  %919 = vmatpush.bf16.msra.mxu0 %v261
  %920 = vmatpush.bf16.msra.mxu0 %v260
  %921 = vmatmul.bf16.gmra.mxu0 %v556
  %v922 = vpop.f32.mrf.mxu0
  %v923 = vadd.f32 %v869, %v922
  %v924 = vpop.f32.mrf.mxu0
  %v925 = vadd.f32 %v871, %v924
  %926 = vmatmul.bf16.gmra.mxu0 %v563
  %v927 = vpop.f32.mrf.mxu0
  %v928 = vadd.f32 %v874, %v927
  %v929 = vpop.f32.mrf.mxu0
  %v930 = vadd.f32 %v876, %v929
  %931 = vmatmul.bf16.gmra.mxu0 %v570
  %v932 = vpop.f32.mrf.mxu0
  %v933 = vadd.f32 %v879, %v932
  %v934 = vpop.f32.mrf.mxu0
  %v935 = vadd.f32 %v881, %v934
  %936 = vmatmul.bf16.gmra.mxu0 %v577
  %v937 = vpop.f32.mrf.mxu0
  %v938 = vadd.f32 %v884, %v937
  %v939 = vpop.f32.mrf.mxu0
  %v940 = vadd.f32 %v886, %v939
  %941 = vmatmul.bf16.gmra.mxu0 %v584
  %v942 = vpop.f32.mrf.mxu0
  %v943 = vadd.f32 %v889, %v942
  %v944 = vpop.f32.mrf.mxu0
  %v945 = vadd.f32 %v891, %v944
  %946 = vmatmul.bf16.gmra.mxu0 %v591
  %v947 = vpop.f32.mrf.mxu0
  %v948 = vadd.f32 %v894, %v947
  %v949 = vpop.f32.mrf.mxu0
  %v950 = vadd.f32 %v896, %v949
  %951 = vmatmul.bf16.gmra.mxu0 %v598
  %v952 = vpop.f32.mrf.mxu0
  %v953 = vadd.f32 %v899, %v952
  %v954 = vpop.f32.mrf.mxu0
  %v955 = vadd.f32 %v901, %v954
  %956 = vmatmul.bf16.gmra.mxu0 %v605
  %v957 = vpop.f32.mrf.mxu0
  %v958 = vadd.f32 %v904, %v957
  %v959 = vpop.f32.mrf.mxu0
  %v960 = vadd.f32 %v906, %v959
  %961 = vmatmul.bf16.gmra.mxu0 %v612
  %v962 = vpop.f32.mrf.mxu0
  %v963 = vadd.f32 %v909, %v962
  %v964 = vpop.f32.mrf.mxu0
  %v965 = vadd.f32 %v911, %v964
  %966 = vdwg.mxu0
  %967 = vmatpush.bf16.msra.mxu0 %v275
  %968 = vmatpush.bf16.msra.mxu0 %v274
  %969 = vmatpush.bf16.msra.mxu0 %v273
  %970 = vmatpush.bf16.msra.mxu0 %v272
  %971 = vmatpush.bf16.msra.mxu0 %v271
  %972 = vmatpush.bf16.msra.mxu0 %v270
  %973 = vmatpush.bf16.msra.mxu0 %v269
  %974 = vmatpush.bf16.msra.mxu0 %v268
  %975 = vmatmul.bf16.gmra.mxu0 %v557
  %v976 = vpop.f32.mrf.mxu0
  %v977 = vadd.f32 %v923, %v976
  %v978 = vpop.f32.mrf.mxu0
  %v979 = vadd.f32 %v925, %v978
  %980 = vmatmul.bf16.gmra.mxu0 %v564
  %v981 = vpop.f32.mrf.mxu0
  %v982 = vadd.f32 %v928, %v981
  %v983 = vpop.f32.mrf.mxu0
  %v984 = vadd.f32 %v930, %v983
  %985 = vmatmul.bf16.gmra.mxu0 %v571
  %v986 = vpop.f32.mrf.mxu0
  %v987 = vadd.f32 %v933, %v986
  %v988 = vpop.f32.mrf.mxu0
  %v989 = vadd.f32 %v935, %v988
  %990 = vmatmul.bf16.gmra.mxu0 %v578
  %v991 = vpop.f32.mrf.mxu0
  %v992 = vadd.f32 %v938, %v991
  %v993 = vpop.f32.mrf.mxu0
  %v994 = vadd.f32 %v940, %v993
  %995 = vmatmul.bf16.gmra.mxu0 %v585
  %v996 = vpop.f32.mrf.mxu0
  %v997 = vadd.f32 %v943, %v996
  %v998 = vpop.f32.mrf.mxu0
  %v999 = vadd.f32 %v945, %v998
  %1000 = vmatmul.bf16.gmra.mxu0 %v592
  %v1001 = vpop.f32.mrf.mxu0
  %v1002 = vadd.f32 %v948, %v1001
  %v1003 = vpop.f32.mrf.mxu0
  %v1004 = vadd.f32 %v950, %v1003
  %1005 = vmatmul.bf16.gmra.mxu0 %v599
  %v1006 = vpop.f32.mrf.mxu0
  %v1007 = vadd.f32 %v953, %v1006
  %v1008 = vpop.f32.mrf.mxu0
  %v1009 = vadd.f32 %v955, %v1008
  %1010 = vmatmul.bf16.gmra.mxu0 %v606
  %v1011 = vpop.f32.mrf.mxu0
  %v1012 = vadd.f32 %v958, %v1011
  %v1013 = vpop.f32.mrf.mxu0
  %v1014 = vadd.f32 %v960, %v1013
  %1015 = vmatmul.bf16.gmra.mxu0 %v613
  %v1016 = vpop.f32.mrf.mxu0
  %v1017 = vadd.f32 %v963, %v1016
  %v1018 = vpop.f32.mrf.mxu0
  %v1019 = vadd.f32 %v965, %v1018
  %1020 = vdwg.mxu0
  %1021 = vmatpush.bf16.msra.mxu0 0
  %1022 = vmatpush.bf16.msra.mxu0 0
  %1023 = vmatpush.bf16.msra.mxu0 %v281
  %1024 = vmatpush.bf16.msra.mxu0 %v280
  %1025 = vmatpush.bf16.msra.mxu0 %v279
  %1026 = vmatpush.bf16.msra.mxu0 %v278
  %1027 = vmatpush.bf16.msra.mxu0 %v277
  %1028 = vmatpush.bf16.msra.mxu0 %v276
  %1029 = vmatmul.bf16.gmra.mxu0 %v671
  %v1030 = vpop.f32.mrf.mxu0
  %v1031 = vadd.f32 %v977, %v1030
  %v1032 = vpop.f32.mrf.mxu0
  %v1033 = vadd.f32 %v979, %v1032
  %1034 = vmatmul.bf16.gmra.mxu0 %v674
  %v1035 = vpop.f32.mrf.mxu0
  %v1036 = vadd.f32 %v982, %v1035
  %v1037 = vpop.f32.mrf.mxu0
  %v1038 = vadd.f32 %v984, %v1037
  %1039 = vmatmul.bf16.gmra.mxu0 %v677
  %v1040 = vpop.f32.mrf.mxu0
  %v1041 = vadd.f32 %v987, %v1040
  %v1042 = vpop.f32.mrf.mxu0
  %v1043 = vadd.f32 %v989, %v1042
  %1044 = vmatmul.bf16.gmra.mxu0 %v680
  %v1045 = vpop.f32.mrf.mxu0
  %v1046 = vadd.f32 %v992, %v1045
  %v1047 = vpop.f32.mrf.mxu0
  %v1048 = vadd.f32 %v994, %v1047
  %1049 = vmatmul.bf16.gmra.mxu0 %v683
  %v1050 = vpop.f32.mrf.mxu0
  %v1051 = vadd.f32 %v997, %v1050
  %v1052 = vpop.f32.mrf.mxu0
  %v1053 = vadd.f32 %v999, %v1052
  %1054 = vmatmul.bf16.gmra.mxu0 %v686
  %v1055 = vpop.f32.mrf.mxu0
  %v1056 = vadd.f32 %v1002, %v1055
  %v1057 = vpop.f32.mrf.mxu0
  %v1058 = vadd.f32 %v1004, %v1057
  %1059 = vmatmul.bf16.gmra.mxu0 %v689
  %v1060 = vpop.f32.mrf.mxu0
  %v1061 = vadd.f32 %v1007, %v1060
  %v1062 = vpop.f32.mrf.mxu0
  %v1063 = vadd.f32 %v1009, %v1062
  %1064 = vmatmul.bf16.gmra.mxu0 %v692
  %v1065 = vpop.f32.mrf.mxu0
  %v1066 = vadd.f32 %v1012, %v1065
  %v1067 = vpop.f32.mrf.mxu0
  %v1068 = vadd.f32 %v1014, %v1067
  %1069 = vmatmul.bf16.gmra.mxu0 %v695
  %v1070 = vpop.f32.mrf.mxu0
  %v1071 = vadd.f32 %v1017, %v1070
  %v1072 = vpop.f32.mrf.mxu0
  %v1073 = vadd.f32 %v1019, %v1072
  %1074 = vdwg.mxu0
  %vm1075 = vcmask 400384
  %1076 = vst.msk [vmem:[%s2] sm:$0xff] %vm1075, %v1031
  %1077 = vst.msk [vmem:[%s2 + $0x8] sm:$0xff] %vm1075, %v1033
  %1078 = vst.msk [vmem:[%s2 + $0x10] sm:$0xff] %vm1075, %v1036
  %1079 = vst.msk [vmem:[%s2 + $0x18] sm:$0xff] %vm1075, %v1038
  %1080 = vst.msk [vmem:[%s2 + $0x20] sm:$0xff] %vm1075, %v1041
  %1081 = vst.msk [vmem:[%s2 + $0x28] sm:$0xff] %vm1075, %v1043
  %1082 = vst.msk [vmem:[%s2 + $0x30] sm:$0xff] %vm1075, %v1046
  %1083 = vst.msk [vmem:[%s2 + $0x38] sm:$0xff] %vm1075, %v1048
  %1084 = vst.msk [vmem:[%s2 + $0x40] sm:$0xff] %vm1075, %v1051
  %1085 = vst.msk [vmem:[%s2 + $0x48] sm:$0xff] %vm1075, %v1053
  %1086 = vst.msk [vmem:[%s2 + $0x50] sm:$0xff] %vm1075, %v1056
  %1087 = vst.msk [vmem:[%s2 + $0x58] sm:$0xff] %vm1075, %v1058
  %1088 = vst.msk [vmem:[%s2 + $0x60] sm:$0xff] %vm1075, %v1061
  %1089 = vst.msk [vmem:[%s2 + $0x68] sm:$0xff] %vm1075, %v1063
  %1090 = vst.msk [vmem:[%s2 + $0x70] sm:$0xff] %vm1075, %v1066
  %1091 = vst.msk [vmem:[%s2 + $0x78] sm:$0xff] %vm1075, %v1068
  %1092 = vst.msk [vmem:[%s2 + $0x80] sm:$0xff] %vm1075, %v1071
  %1093 = vst.msk [vmem:[%s2 + $0x88] sm:$0xff] %vm1075, %v1073
  // Predicated region
  $region10: #{tpu_custom_call.1} parent=0 // pred_check
    _
  $region11: #{tpu_custom_call.1} parent=0 // pred_check_branch
    %1095 = sbr.rel (0) target = $region13
  $region12: #{tpu_custom_call.1} parent=0 // pred_region
    _
  $region13: #{tpu_custom_call.1} parent=0 // pred_fallthru
    _
  // Predicated region
  $region14: #{tpu_custom_call.1} parent=0 // pred_check
    _
  $region15: #{tpu_custom_call.1} parent=0 // pred_check_branch
    %1097 = sbr.rel (0) target = $region17
  $region16: #{tpu_custom_call.1} parent=0 // pred_region
    _
  $region17: #{tpu_custom_call.1} parent=0 // pred_fallthru
    _

</llo_original>
